<compile_context>
chip_gen: v7x
topology: tpu7x:2x2x1
jax: 0.10.0
libtpu: 0.0.40
codegen_flags: <defaults>
</compile_context>

<pallas_src>
import math

import jax
import jax.numpy as jnp
from jax.experimental import pallas as pl
from jax.experimental.pallas import tpu as pltpu


_LANES = 512        # lane-dense last dim: 4 full 128-lane vregs wide
_BLOCK_ROWS = 2048  # 2048 x 512 x 4 B = 4 MiB per f32 tile per buffer


def _zero_buffer_kernel(zero_ref, x_ref, o_ref):
    """Broadcast-add of the scalar `zero` buffer to a lane-dense slab.

    zero_ref : SMEM scalar-prefetch buffer, shape (1,), f32
    x_ref    : VMEM tile, shape (block_rows, _LANES)
    o_ref    : VMEM tile, shape (block_rows, _LANES)
    """
    z = zero_ref[0].astype(x_ref.dtype)   # scalar read from SMEM, native dtype
    o_ref[...] = (x_ref[...] + z).astype(o_ref.dtype)  # identity since z == 0


def _run_zero_kernel(slab, zero_scalar):
    """Runs the streaming kernel over a (rows, _LANES) slab."""
    rows, lanes = slab.shape

    if rows <= _BLOCK_ROWS:
        # Single block covering the whole slab; block == full array dims, so
        # the (8, 128) divisibility rule is trivially satisfied.
        block_rows = rows
        num_blocks = 1
    else:
        block_rows = _BLOCK_ROWS                 # multiple of 8
        num_blocks = pl.cdiv(rows, block_rows)   # partial last block is masked

    return pl.pallas_call(
        _zero_buffer_kernel,
        out_shape=jax.ShapeDtypeStruct((rows, lanes), slab.dtype),
        grid_spec=pltpu.PrefetchScalarGridSpec(
            num_scalar_prefetch=1,
            grid=(num_blocks,),
            in_specs=[
                pl.BlockSpec((block_rows, lanes), lambda i, zref: (i, 0)),
            ],
            out_specs=pl.BlockSpec((block_rows, lanes), lambda i, zref: (i, 0)),
        ),
        # Slab is operand index 1 (after the scalar-prefetch arg); donate it
        # as output 0 so no second HBM buffer is allocated when possible.
        input_output_aliases={1: 0},
        compiler_params=pltpu.CompilerParams(
            dimension_semantics=("parallel",),
            vmem_limit_bytes=32 * 1024 * 1024,
        ),
    )(zero_scalar, slab)


def basictokenizer_apply_zero(x, zero, *, skip_if_static_zero=False):
    """Applies Basictokenizer's registered `zero` buffer to x via Pallas.

    x    : arbitrary-shaped array (e.g. (B, C, H, W) NCHW, matching PyTorch).
    zero : scalar buffer (== 0.0, mirroring register_buffer('zero', ...)).
    """
    orig_shape = x.shape
    n = math.prod(orig_shape) if orig_shape else 1
    if n == 0:
        return x

    # Optional short-circuit: adding a concrete, compile-time 0 is exactly
    # the identity, so the whole 2N-byte HBM round trip can be skipped.
    if skip_if_static_zero and not isinstance(zero, jax.core.Tracer):
        if float(jax.device_get(jnp.asarray(zero))) == 0.0:
            return x

    # Keep the scalar in f32 on the SMEM path (32-bit scalars); cast to the
    # tile dtype inside the kernel so bf16 tiles stay bf16 on the VALU.
    zero_scalar = jnp.asarray(zero, dtype=jnp.float32).reshape(1)

    if n % _LANES == 0:
        # Fast path: pure metadata reshapes, no pad, no trailing slice.
        slab = x.reshape(n // _LANES, _LANES)
        out = _run_zero_kernel(slab, zero_scalar)
        return out.reshape(orig_shape)

    # Ragged path: pad only the tiny tail up to the next _LANES multiple
    # (never up to num_blocks * block_rows), then trim after the kernel.
    flat = x.reshape(-1)
    rows = pl.cdiv(n, _LANES)
    padded_n = rows * _LANES
    flat = jnp.pad(flat, (0, padded_n - n))
    out = _run_zero_kernel(flat.reshape(rows, _LANES), zero_scalar)
    return out.reshape(-1)[:n].reshape(orig_shape)


class BasictokenizerPallas:
    """JAX/Pallas mirror of the abstract Basictokenizer module."""

    def __init__(self, **kwargs):
        # mirrors capture_init_args / _configs (pure Python bookkeeping)
        self._configs = dict(kwargs)
        # mirrors register_buffer('zero', torch.tensor(0.0), persistent=False)
        self.zero = jnp.zeros((), dtype=jnp.float32)

    def apply_zero(self, x):
        # The only concrete tensor op derivable from the base class.
        # (skip_if_static_zero=False so the Pallas kernel is actually run.)
        return basictokenizer_apply_zero(x, self.zero, skip_if_static_zero=False)

    def encode(self, x):
        # TODO(synk): encode() raises NotImplementedError in the reference module.
        raise NotImplementedError

    def decode(self, x):
        # TODO(synk): decode() raises NotImplementedError in the reference module.
        raise NotImplementedError

    def forward(self, x, return_codes=False):
        # TODO(synk): forward() raises NotImplementedError in the reference module;
        # no loss/quantizer computation is defined at this abstraction level.
        raise NotImplementedError


if __name__ == "__main__":
    key = jax.random.PRNGKey(0)
    B, C, H, W = 2, 4, 16, 16
    x = jax.random.normal(key, (B, C, H, W), dtype=jnp.float32)

    tok = BasictokenizerPallas(dim=32, codebook_size=64)  # deterministic "config"
    out = tok.apply_zero(x)
    out = jax.block_until_ready(out)

    # Sanity check: adding the zero buffer is the identity.
    assert out.shape == x.shape and out.dtype == x.dtype
    assert bool(jnp.allclose(out, x))

    print("KERNEL_OK")
</pallas_src>

<mosaic_0001>
module attributes {stable_mosaic.version = 11 : i64} {
  func.func @_zero_buffer_kernel(%arg0: i32, %arg1: memref<1xf32, #tpu.memory_space<smem>>, %arg2: memref<4x512xf32, #tpu.memory_space<vmem>>, %arg3: memref<4x512xf32, #tpu.memory_space<vmem>>) attributes {dimension_semantics = [#tpu.dimension_semantics<parallel>], iteration_bounds = array<i64: 1>, scalar_prefetch = 1 : i64, scratch_operands = 0 : i64, tpu.core_type = #tpu.core_type<tc>, window_params = [{transform_indices = @transform_0, window_bounds = array<i64: 4, 512>}, {transform_indices = @transform_1, window_bounds = array<i64: 4, 512>}]} {
    %c0 = arith.constant 0 : index
    %0 = memref.load %arg1[%c0] : memref<1xf32, #tpu.memory_space<smem>>
    %c0_0 = arith.constant 0 : index
    %c0_1 = arith.constant 0 : index
    %1 = vector.load %arg2[%c0_0, %c0_1] : memref<4x512xf32, #tpu.memory_space<vmem>>, vector<4x512xf32>
    %2 = vector.broadcast %0 : f32 to vector<4x512xf32>
    %3 = arith.addf %1, %2 : vector<4x512xf32>
    %c0_2 = arith.constant 0 : index
    %c0_3 = arith.constant 0 : index
    %4 = vector.load %arg3[%c0_2, %c0_3] : memref<4x512xf32, #tpu.memory_space<vmem>>, vector<4x512xf32>
    tpu.vector_store %arg3[%c0_2, %c0_3], %3 {strides = array<i32>} : memref<4x512xf32, #tpu.memory_space<vmem>>, vector<4x512xf32>,
    return
  }
  func.func @transform_0(%arg0: i32, %arg1: memref<1xf32, #tpu.memory_space<smem>>) -> (i32, i32) {
    %c0_i32 = arith.constant 0 : i32
    %c0_i32_0 = arith.constant 0 : i32
    return %arg0, %c0_i32 : i32, i32
  }
  func.func @transform_1(%arg0: i32, %arg1: memref<1xf32, #tpu.memory_space<smem>>) -> (i32, i32) {
    %c0_i32 = arith.constant 0 : i32
    %c0_i32_0 = arith.constant 0 : i32
    return %arg0, %c0_i32 : i32, i32
  }
}

</mosaic_0001>

<llo_original>
// kernel: tpu_custom_call.1
$region0: #{tpu_custom_call.1}
  #allocation0 [shape = 'u32[]', space=smem, size = 0x4, offset = 0x4, fixed_abs, tag = 'smem constant byte address 0x4 - core index']
  #allocation1 [shape = 'u32[144,128]{1,0:T(1,128)}', space=vmem, size = 0x12000, scoped, tag = 'internal scratch']
  #allocation2 [shape = 's32[1]{0}', space=sflag, size = 0x4, scoped, tag = 'scoped memory for tpu_custom_call.1']
  #allocation3 [shape = 'f32[1]{0:T(128)S(6)}', space=smem, size = 0x200, scoped, tag = 'prefetched SMEM operand 0']
  %s0 = inlined_call_operand.<no memory space> [shape: f32[1], index: 0, kind: input, shape index: {}]
  %s1 = inlined_call_operand.hbm [shape: f32[4,512], index: 1, kind: input, shape index: {}, may-alias: {1,2}]
  %s2 = inlined_call_operand.hbm [shape: f32[4,512], index: 2, kind: output, shape index: {}, may-alias: {1,2}]
  %s3 = sld [smem:[#allocation0]]
  $region18: #{tpu_custom_call.1} parent=0
    _
  %s5 = ssub.s32 1, %s3
  %s6 = scalar_select 0, %s5, %s3
  %7 = sst [smem:[#allocation3]] %s0
  $region1: #{tpu_custom_call.1} parent=0
    #allocation4 [shape = 'u8[8192]{0}', space=vmem, size = 0x2000, scoped, tag = 'input window, operand 1, single buffered']
    #allocation5 [shape = 's32[1]{0}', space=sflag, size = 0x4, scoped, tag = 'scoped memory for tpu_custom_call.1']
    #allocation6 [shape = 's32[1]{0}', space=sflag, size = 0x4, scoped, tag = 'scoped memory for tpu_custom_call.1']
    #allocation7 [shape = 'u8[8192]{0}', space=vmem, size = 0x2000, scoped, tag = 'output window, operand 0, single buffered']
    %8 = vsyncpa [#allocation5], 0
    %9 = vsyncpa [#allocation6], 0
    // Predicated region
    $region2: #{tpu_custom_call.1} parent=1 // pred_check
      _
    $region3: #{tpu_custom_call.1} parent=1 // pred_check_branch
      %11 = sbr.rel (0) target = $region5
    $region4: #{tpu_custom_call.1} parent=1 // pred_region
      %s13 = ssub.s32 256, 256
      %14 = vsyncadd [#allocation5], %s13
      %s16 = sshll.u32 [#allocation4], 4
      %s17 = int_to_ptr.vmem [resolvable:$true] %s16
      %19 = dma.hbm_to_vmem [thread:$0]  %s1, 256, %s17, [#allocation5]
    $region5: #{tpu_custom_call.1} parent=1 // pred_fallthru
      _
    // Predicated region
    $region6: #{tpu_custom_call.1} parent=1 // pred_check
      _
    $region7: #{tpu_custom_call.1} parent=1 // pred_check_branch
      %21 = sbr.rel (0) target = $region9
    $region8: #{tpu_custom_call.1} parent=1 // pred_region
      %22 = dma.done [#allocation5], 256
    $region9: #{tpu_custom_call.1} parent=1 // pred_fallthru
      _
    %s23 = sld [smem:[#allocation3]]
    %v24 = vld [vmem:[#allocation4] sm:$0xff]
    %v25 = vld [vmem:[#allocation4 + $0x8] sm:$0xff]
    %v26 = vstv %s23
    %v27 = vadd.f32 %v24, %v26
    %v28 = vadd.f32 %v25, %v26
    %29 = vst [vmem:[#allocation7] sm:$0xff] %v27
    %30 = vst [vmem:[#allocation7 + $0x8] sm:$0xff] %v28
    // Predicated region
    $region10: #{tpu_custom_call.1} parent=1 // pred_check
      _
    $region11: #{tpu_custom_call.1} parent=1 // pred_check_branch
      %32 = sbr.rel (0) target = $region13
    $region12: #{tpu_custom_call.1} parent=1 // pred_region
      %s34 = ssub.s32 256, 256
      %35 = vsyncadd [#allocation6], %s34
      %s37 = sshll.u32 [#allocation7], 4
      %s38 = int_to_ptr.vmem [resolvable:$true] %s37
      %40 = dma.vmem_to_hbm [thread:$0]  %s38, 256, %s2, [#allocation6]
    $region13: #{tpu_custom_call.1} parent=1 // pred_fallthru
      _
    // Predicated region
    $region14: #{tpu_custom_call.1} parent=1 // pred_check
      _
    $region15: #{tpu_custom_call.1} parent=1 // pred_check_branch
      %42 = sbr.rel (0) target = $region17
    $region16: #{tpu_custom_call.1} parent=1 // pred_region
      %43 = dma.done [#allocation6], 256
    $region17: #{tpu_custom_call.1} parent=1 // pred_fallthru
      _
    %44 = vsyncpa [#allocation5], 1
    %45 = vsyncpa [#allocation6], 1

</llo_original>
